<compile_context>
chip_gen: v7x
topology: tpu7x:2x2x1
jax: 0.10.0
libtpu: 0.0.40
codegen_flags: <defaults>
</compile_context>

<pallas_src>
import jax
import jax.numpy as jnp
from jax.experimental import pallas as pl
from jax.experimental.pallas import tpu as pltpu

_LANE = 128
_SUBLANE = 8
_ACC_ROWS = 32          # (32, 128) f32 accumulator = 4 independent vregs
_CHUNK_ROWS = 256       # rows cast+folded per inner step (128 KiB f32 temp)

assert _CHUNK_ROWS % _ACC_ROWS == 0 and _ACC_ROWS % _SUBLANE == 0


def _make_sum_kernel(tile_rows, valid_rows_last):
    """Build a streaming-sum kernel for a (rows, 128) lane-dense slab.

    tile_rows:       rows per grid block (multiple of 8).
    valid_rows_last: valid rows in the final block (static, multiple of 8).
    """
    needs_tail = valid_rows_last != tile_rows

    def fold_rows(kl_ref, acc_ref, n_rows):
        # Fold n_rows (static, multiple of 8) of the current tile into acc.
        n_full = n_rows // _CHUNK_ROWS
        rem = n_rows % _CHUNK_ROWS          # static, multiple of 8

        if n_full > 0:
            def body(c, carry):
                start = pl.multiple_of(c * _CHUNK_ROWS, _CHUNK_ROWS)
                x = kl_ref[pl.ds(start, _CHUNK_ROWS), :].astype(jnp.float32)
                acc_ref[...] += x.reshape(-1, _ACC_ROWS, _LANE).sum(axis=0)
                return carry

            jax.lax.fori_loop(0, n_full, body, 0, unroll=n_full <= 8)

        if rem > 0:
            start = n_full * _CHUNK_ROWS    # static
            x = kl_ref[pl.ds(start, rem), :].astype(jnp.float32)
            acc_ref[0:_SUBLANE, :] += x.reshape(-1, _SUBLANE, _LANE).sum(axis=0)

    def kernel(kl_ref, out_ref, acc_ref):
        i = pl.program_id(0)
        nb = pl.num_programs(0)

        @pl.when(i == 0)
        def _():
            acc_ref[...] = jnp.zeros_like(acc_ref)

        if needs_tail:
            # Full blocks vs. the (static-size) partial final block.  The
            # out-of-bounds rows of the final block are never read.
            @pl.when(i < nb - 1)
            def _():
                fold_rows(kl_ref, acc_ref, tile_rows)

            @pl.when(i == nb - 1)
            def _():
                fold_rows(kl_ref, acc_ref, valid_rows_last)
        else:
            fold_rows(kl_ref, acc_ref, tile_rows)

        # Single cross-sublane + cross-lane reduce, epilogue only.
        @pl.when(i == nb - 1)
        def _():
            out_ref[0, 0] = jnp.sum(acc_ref[...])

    return kernel


def beta_vae_regularizer(kl, beta, *, max_tile_rows=8192,
                         small_input_threshold=65536):
    """beta * kl.sum() -- BetaVAE.forward (other forward args are unused).

    Args:
      kl:   any-shape float array of per-sample/per-dim KL terms.
      beta: python float / scalar hyperparameter.
    Returns:
      float32 scalar (shape ()).
    """
    kl_flat = kl.reshape(-1)
    n = kl_flat.shape[0]
    beta_f = jnp.float32(beta)

    align = _SUBLANE * _LANE                    # 1024 elems -> rows % 8 == 0
    n_aligned = (n // align) * align

    # Tiny inputs (typical BetaVAE kl): a fused XLA reduce beats the
    # pallas_call launch overhead.
    if n_aligned == 0 or n < small_input_threshold:
        return beta_f * jnp.sum(kl_flat, dtype=jnp.float32)

    # Ragged tail (< 1024 elems) via XLA; aligned prefix goes to the kernel.
    # No jnp.pad => no extra full-array HBM copy; the prefix reshape below is
    # a zero-copy bitcast and the input dtype (e.g. bf16) is preserved in HBM.
    tail_sum = jnp.float32(0.0)
    main = kl_flat
    if n_aligned != n:
        tail_sum = jnp.sum(kl_flat[n_aligned:], dtype=jnp.float32)
        main = kl_flat[:n_aligned]

    rows = n_aligned // _LANE                   # multiple of 8
    kl2d = main.reshape(rows, _LANE)            # lane-dense slab

    # Guard: tile_rows must be a multiple of 8 (sublane) -- round the kwarg.
    max_tile_rows = max(_SUBLANE, (max_tile_rows // _SUBLANE) * _SUBLANE)
    tile_rows = min(rows, max_tile_rows)        # multiple of 8
    grid_size = pl.cdiv(rows, tile_rows)
    valid_rows_last = rows - (grid_size - 1) * tile_rows   # multiple of 8

    kernel = _make_sum_kernel(tile_rows, valid_rows_last)

    # 8192x128xf32 tile = 4 MiB; double-buffered 8 MiB -- fits under every
    # generation's scoped-VMEM default (v5e 16 MiB, v6e/v7x 32 MiB).
    out = pl.pallas_call(
        kernel,
        out_shape=jax.ShapeDtypeStruct((1, 1), jnp.float32),
        grid_spec=pltpu.PrefetchScalarGridSpec(
            num_scalar_prefetch=0,
            grid=(grid_size,),
            in_specs=[pl.BlockSpec((tile_rows, _LANE), lambda i: (i, 0))],
            out_specs=pl.BlockSpec((1, 1), lambda i: (0, 0),
                                   memory_space=pltpu.MemorySpace.SMEM),
            scratch_shapes=[pltpu.VMEM((_ACC_ROWS, _LANE), jnp.float32)],
        ),
        compiler_params=pltpu.CompilerParams(
            dimension_semantics=("arbitrary",),   # single reduction axis
        ),
    )(kl2d)

    return beta_f * (out[0, 0] + tail_sum)


if __name__ == "__main__":
    key = jax.random.PRNGKey(0)
    beta = 4.0
    k1, k2, k3 = jax.random.split(key, 3)

    # Case A: f32, aligned size -- exercises the kernel's chunked fold path.
    kl_a = jax.random.uniform(k1, (512, 64), dtype=jnp.float32)
    res_a = beta_vae_regularizer(kl_a, beta, small_input_threshold=0)
    jax.block_until_ready(res_a)
    ref_a = beta * jnp.sum(kl_a, dtype=jnp.float32)
    assert jnp.allclose(res_a, ref_a, rtol=1e-5, atol=1e-3), (res_a, ref_a)

    # Case B: bf16, ragged size, multi-block grid with a partial final block
    # (wrapper tail sum + in-kernel static remainder path + f32 accumulation).
    kl_b = jax.random.uniform(k2, (100, 31), dtype=jnp.float32).astype(jnp.bfloat16)
    res_b = beta_vae_regularizer(kl_b, beta, max_tile_rows=16,
                                 small_input_threshold=0)
    jax.block_until_ready(res_b)
    ref_b = beta * jnp.sum(kl_b.astype(jnp.float32))
    assert jnp.allclose(res_b, ref_b, rtol=1e-4, atol=1e-2), (res_b, ref_b)

    # Case C: typical BetaVAE kl of shape (batch, num_latents) -- small-input
    # fast path (pure XLA reduce).
    kl_c = jax.random.uniform(k3, (16, 32), dtype=jnp.float32)
    res_c = beta_vae_regularizer(kl_c, beta)
    jax.block_until_ready(res_c)
    ref_c = beta * jnp.sum(kl_c, dtype=jnp.float32)
    assert jnp.allclose(res_c, ref_c, rtol=1e-6, atol=1e-5), (res_c, ref_c)

    print("KERNEL_OK")
</pallas_src>

<mosaic_0001>
module attributes {stable_mosaic.version = 11 : i64} {
  func.func @kernel(%arg0: i32, %arg1: memref<256x128xf32, #tpu.memory_space<vmem>>, %arg2: memref<1x1xf32, #tpu.memory_space<smem>>, %arg3: memref<32x128xf32, #tpu.memory_space<vmem>>) attributes {dimension_semantics = [#tpu.dimension_semantics<arbitrary>], iteration_bounds = array<i64: 1>, scalar_prefetch = 0 : i64, scratch_operands = 1 : i64, tpu.core_type = #tpu.core_type<tc>, window_params = [{transform_indices = @transform_0, window_bounds = array<i64: 256, 128>}, {transform_indices = @transform_1, window_bounds = array<i64: 1, 1>}]} {
    %c0_i32 = arith.constant 0 : i32
    %0 = arith.cmpi eq, %arg0, %c0_i32 : i32
    %1 = arith.extui %0 : i1 to i32
    %c0_i32_0 = arith.constant 0 : i32
    %2 = arith.cmpi ne, %1, %c0_i32_0 : i32
    scf.if %2 {
      %cst_8 = arith.constant 0.000000e+00 : f32
      %15 = vector.broadcast %cst_8 : f32 to vector<32x128xf32>
      %c0_9 = arith.constant 0 : index
      %c0_10 = arith.constant 0 : index
      %16 = vector.load %arg3[%c0_9, %c0_10] : memref<32x128xf32, #tpu.memory_space<vmem>>, vector<32x128xf32>
      tpu.vector_store %arg3[%c0_9, %c0_10], %15 {strides = array<i32>} : memref<32x128xf32, #tpu.memory_space<vmem>>, vector<32x128xf32>,
    } else {
    }
    %c0_i32_1 = arith.constant 0 : i32
    %c256_i32 = arith.constant 256 : i32
    %3 = arith.muli %c0_i32_1, %c256_i32 : i32
    %4 = tpu.assume_multiple %3, 256 : i32
    %5 = arith.index_cast %4 : i32 to index
    %c0 = arith.constant 0 : index
    %6 = vector.load %arg1[%5, %c0] : memref<256x128xf32, #tpu.memory_space<vmem>>, vector<256x128xf32>
    %c0_2 = arith.constant 0 : index
    %c0_3 = arith.constant 0 : index
    %7 = vector.load %arg3[%c0_2, %c0_3] : memref<32x128xf32, #tpu.memory_space<vmem>>, vector<32x128xf32>
    %8 = vector.shape_cast %6 : vector<256x128xf32> to vector<8x32x128xf32>
    %cst = arith.constant dense<0.000000e+00> : vector<32x128xf32>
    %9 = vector.multi_reduction <add>, %8, %cst [0] : vector<8x32x128xf32> to vector<32x128xf32>
    %10 = arith.addf %7, %9 : vector<32x128xf32>
    %c0_4 = arith.constant 0 : index
    %c0_5 = arith.constant 0 : index
    %11 = vector.load %arg3[%c0_4, %c0_5] : memref<32x128xf32, #tpu.memory_space<vmem>>, vector<32x128xf32>
    tpu.vector_store %arg3[%c0_4, %c0_5], %10 {strides = array<i32>} : memref<32x128xf32, #tpu.memory_space<vmem>>, vector<32x128xf32>,
    %c1_i32 = arith.constant 1 : i32
    %c0_i32_6 = arith.constant 0 : i32
    %12 = arith.cmpi eq, %arg0, %c0_i32_6 : i32
    %13 = arith.extui %12 : i1 to i32
    %c0_i32_7 = arith.constant 0 : i32
    %14 = arith.cmpi ne, %13, %c0_i32_7 : i32
    scf.if %14 {
      %c0_8 = arith.constant 0 : index
      %c0_9 = arith.constant 0 : index
      %15 = vector.load %arg3[%c0_8, %c0_9] : memref<32x128xf32, #tpu.memory_space<vmem>>, vector<32x128xf32>
      %16 = vector.shape_cast %15 : vector<32x128xf32> to vector<1x32x128xf32>
      %cst_10 = arith.constant dense<0.000000e+00> : vector<1xf32>
      %17 = vector.multi_reduction <add>, %16, %cst_10 [1, 2] : vector<1x32x128xf32> to vector<1xf32>
      %18 = vector.shape_cast %17 : vector<1xf32> to vector<1x1x1xf32>
      %19 = vector.extract %18[0, 0, 0] : f32 from vector<1x1x1xf32>
      %c0_11 = arith.constant 0 : index
      %c0_12 = arith.constant 0 : index
      %20 = memref.load %arg2[%c0_11, %c0_12] : memref<1x1xf32, #tpu.memory_space<smem>>
      memref.store %19, %arg2[%c0_11, %c0_12] : memref<1x1xf32, #tpu.memory_space<smem>>
    } else {
    }
    return
  }
  func.func @transform_0(%arg0: i32) -> (i32, i32) {
    %c0_i32 = arith.constant 0 : i32
    %c0_i32_0 = arith.constant 0 : i32
    return %arg0, %c0_i32 : i32, i32
  }
  func.func @transform_1(%arg0: i32) -> (i32, i32) {
    %c0_i32 = arith.constant 0 : i32
    %c0_i32_0 = arith.constant 0 : i32
    %c0_i32_1 = arith.constant 0 : i32
    return %c0_i32, %c0_i32_0 : i32, i32
  }
}

</mosaic_0001>

<llo_original>
// kernel: tpu_custom_call.1
$region0: #{tpu_custom_call.1}
  #allocation0 [shape = 'u32[]', space=smem, size = 0x4, offset = 0x4, fixed_abs, tag = 'smem constant byte address 0x4 - core index']
  #allocation1 [shape = 'u32[144,128]{1,0:T(1,128)}', space=vmem, size = 0x12000, scoped, tag = 'internal scratch']
  #allocation2 [shape = 'f32[32,128]{1,0:T(8,128)}', space=vmem, size = 0x4000, scoped, tag = 'scratch operand']
  %s0 = inlined_call_operand.hbm [shape: f32[256,128], index: 0, kind: input, shape index: {}]
  %s1 = inlined_call_operand.hbm [shape: f32[1,1], index: 1, kind: output, shape index: {}]
  %s2 = sld [smem:[#allocation0]]
  $region26: #{tpu_custom_call.1} parent=0
    _
  %s4 = ssub.s32 1, %s2
  %s5 = scalar_select 0, %s4, %s2
  $region1: #{tpu_custom_call.1} parent=0
    #allocation3 [shape = 'u8[131072]{0}', space=vmem, size = 0x20000, scoped, tag = 'input window, operand 0, single buffered']
    #allocation4 [shape = 's32[1]{0}', space=sflag, size = 0x4, scoped, tag = 'scoped memory for tpu_custom_call.1']
    #allocation5 [shape = 's32[1]{0}', space=sflag, size = 0x4, scoped, tag = 'scoped memory for tpu_custom_call.1']
    #allocation6 [shape = 'u8[512]{0}', space=smem, size = 0x200, scoped, tag = 'output window, operand 0, single buffered']
    %6 = vsyncpa [#allocation4], 0
    %7 = vsyncpa [#allocation5], 0
    // Predicated region
    $region2: #{tpu_custom_call.1} parent=1 // pred_check
      _
    $region3: #{tpu_custom_call.1} parent=1 // pred_check_branch
      %9 = sbr.rel (0) target = $region5
    $region4: #{tpu_custom_call.1} parent=1 // pred_region
      %s11 = ssub.s32 4096, 4096
      %12 = vsyncadd [#allocation4], %s11
      %s13 = sshll.u32 [#allocation3], 4
      %s14 = int_to_ptr.vmem [resolvable:$true] %s13
      %19 = dma.hbm_to_vmem [thread:$0]  %s0, 4096, %s14, [#allocation4], 128, 128, 8
    $region5: #{tpu_custom_call.1} parent=1 // pred_fallthru
      _
    // Predicated region
    $region6: #{tpu_custom_call.1} parent=1 // pred_check
      _
    $region7: #{tpu_custom_call.1} parent=1 // pred_check_branch
      %21 = sbr.rel (0) target = $region9
    $region8: #{tpu_custom_call.1} parent=1 // pred_region
      %22 = dma.done [#allocation4], 4096
    $region9: #{tpu_custom_call.1} parent=1 // pred_fallthru
      _
    %p23 = scmp.eq.s32.totalorder 0, 0
    // Predicated region
    $region10: #{tpu_custom_call.1} parent=1 // pred_check
      %p24 = pneg %p23
    $region11: #{tpu_custom_call.1} parent=1 // pred_check_branch
      %26 = sbr.rel (%p24) target = $region13
    $region12: #{tpu_custom_call.1} parent=1 // pred_region
      %27 = vst [vmem:[#allocation2] sm:$0xff] 0.0
      %28 = vst [vmem:[#allocation2 + $0x8] sm:$0xff] 0.0
      %29 = vst [vmem:[#allocation2 + $0x10] sm:$0xff] 0.0
      %30 = vst [vmem:[#allocation2 + $0x18] sm:$0xff] 0.0
    $region13: #{tpu_custom_call.1} parent=1 // pred_fallthru
      _
    %v31 = vld [vmem:[#allocation3] sm:$0xff]
    %v32 = vld [vmem:[#allocation3 + $0x8] sm:$0xff]
    %v33 = vld [vmem:[#allocation3 + $0x10] sm:$0xff]
    %v34 = vld [vmem:[#allocation3 + $0x18] sm:$0xff]
    %v35 = vld [vmem:[#allocation3 + $0x20] sm:$0xff]
    %v36 = vld [vmem:[#allocation3 + $0x28] sm:$0xff]
    %v37 = vld [vmem:[#allocation3 + $0x30] sm:$0xff]
    %v38 = vld [vmem:[#allocation3 + $0x38] sm:$0xff]
    %v39 = vld [vmem:[#allocation3 + $0x40] sm:$0xff]
    %v40 = vld [vmem:[#allocation3 + $0x48] sm:$0xff]
    %v41 = vld [vmem:[#allocation3 + $0x50] sm:$0xff]
    %v42 = vld [vmem:[#allocation3 + $0x58] sm:$0xff]
    %v43 = vld [vmem:[#allocation3 + $0x60] sm:$0xff]
    %v44 = vld [vmem:[#allocation3 + $0x68] sm:$0xff]
    %v45 = vld [vmem:[#allocation3 + $0x70] sm:$0xff]
    %v46 = vld [vmem:[#allocation3 + $0x78] sm:$0xff]
    %v47 = vld [vmem:[#allocation3 + $0x80] sm:$0xff]
    %v48 = vld [vmem:[#allocation3 + $0x88] sm:$0xff]
    %v49 = vld [vmem:[#allocation3 + $0x90] sm:$0xff]
    %v50 = vld [vmem:[#allocation3 + $0x98] sm:$0xff]
    %v51 = vld [vmem:[#allocation3 + $0xa0] sm:$0xff]
    %v52 = vld [vmem:[#allocation3 + $0xa8] sm:$0xff]
    %v53 = vld [vmem:[#allocation3 + $0xb0] sm:$0xff]
    %v54 = vld [vmem:[#allocation3 + $0xb8] sm:$0xff]
    %v55 = vld [vmem:[#allocation3 + $0xc0] sm:$0xff]
    %v56 = vld [vmem:[#allocation3 + $0xc8] sm:$0xff]
    %v57 = vld [vmem:[#allocation3 + $0xd0] sm:$0xff]
    %v58 = vld [vmem:[#allocation3 + $0xd8] sm:$0xff]
    %v59 = vld [vmem:[#allocation3 + $0xe0] sm:$0xff]
    %v60 = vld [vmem:[#allocation3 + $0xe8] sm:$0xff]
    %v61 = vld [vmem:[#allocation3 + $0xf0] sm:$0xff]
    %v62 = vld [vmem:[#allocation3 + $0xf8] sm:$0xff]
    %v63 = vld [vmem:[#allocation2] sm:$0xff]
    %v64 = vld [vmem:[#allocation2 + $0x8] sm:$0xff]
    %v65 = vld [vmem:[#allocation2 + $0x10] sm:$0xff]
    %v66 = vld [vmem:[#allocation2 + $0x18] sm:$0xff]
    %v67 = vadd.f32 %v31, %v35
    %v68 = vadd.f32 %v67, %v39
    %v69 = vadd.f32 %v68, %v43
    %v70 = vadd.f32 %v69, %v47
    %v71 = vadd.f32 %v70, %v51
    %v72 = vadd.f32 %v71, %v55
    %v73 = vadd.f32 %v72, %v59
    %v74 = vadd.f32 %v32, %v36
    %v75 = vadd.f32 %v74, %v40
    %v76 = vadd.f32 %v75, %v44
    %v77 = vadd.f32 %v76, %v48
    %v78 = vadd.f32 %v77, %v52
    %v79 = vadd.f32 %v78, %v56
    %v80 = vadd.f32 %v79, %v60
    %v81 = vadd.f32 %v33, %v37
    %v82 = vadd.f32 %v81, %v41
    %v83 = vadd.f32 %v82, %v45
    %v84 = vadd.f32 %v83, %v49
    %v85 = vadd.f32 %v84, %v53
    %v86 = vadd.f32 %v85, %v57
    %v87 = vadd.f32 %v86, %v61
    %v88 = vadd.f32 %v34, %v38
    %v89 = vadd.f32 %v88, %v42
    %v90 = vadd.f32 %v89, %v46
    %v91 = vadd.f32 %v90, %v50
    %v92 = vadd.f32 %v91, %v54
    %v93 = vadd.f32 %v92, %v58
    %v94 = vadd.f32 %v93, %v62
    %v95 = vadd.f32 %v63, %v73
    %v96 = vadd.f32 %v64, %v80
    %v97 = vadd.f32 %v65, %v87
    %v98 = vadd.f32 %v66, %v94
    %99 = vst [vmem:[#allocation2] sm:$0xff] %v95
    %100 = vst [vmem:[#allocation2 + $0x8] sm:$0xff] %v96
    %101 = vst [vmem:[#allocation2 + $0x10] sm:$0xff] %v97
    %102 = vst [vmem:[#allocation2 + $0x18] sm:$0xff] %v98
    // Predicated region
    $region14: #{tpu_custom_call.1} parent=1 // pred_check
      %p103 = pneg %p23
    $region15: #{tpu_custom_call.1} parent=1 // pred_check_branch
      %105 = sbr.rel (%p103) target = $region17
    $region16: #{tpu_custom_call.1} parent=1 // pred_region
      %v106 = vld [vmem:[#allocation2] sm:$0xff]
      %v107 = vld [vmem:[#allocation2 + $0x8] sm:$0xff]
      %v108 = vld [vmem:[#allocation2 + $0x10] sm:$0xff]
      %v109 = vld [vmem:[#allocation2 + $0x18] sm:$0xff]
      %v110 = vadd.f32 %v106, %v107
      %v111 = vadd.f32 %v110, %v108
      %v112 = vadd.f32 %v111, %v109
      %113 = vadd.xlane.f32.xlu0 %v112
      %v114 = vpop.xlane.xlu0 %113
      %v115 = vrot.slane %v114, 4
      %v116 = vadd.f32 %v114, %v115
      %v117 = vrot.slane %v116, 2
      %v118 = vadd.f32 %v116, %v117
      %v119 = vrot.slane %v118, 1
      %v120 = vadd.f32 %v118, %v119
      %s121 = vtos %v120
      %s122 = scalar_lea.smem [#allocation6], 0
      %123 = sst [smem:[%s122]] %s121
    $region17: #{tpu_custom_call.1} parent=1 // pred_fallthru
      _
    // Predicated region
    $region18: #{tpu_custom_call.1} parent=1 // pred_check
      _
    $region19: #{tpu_custom_call.1} parent=1 // pred_check_branch
      %125 = sbr.rel (0) target = $region21
    $region20: #{tpu_custom_call.1} parent=1 // pred_region
      %s127 = ssub.s32 16, 16
      %128 = vsyncadd [#allocation5], %s127
      %131 = dma.smem_to_hbm [#allocation6], 16, %s1, [#allocation5]
    $region21: #{tpu_custom_call.1} parent=1 // pred_fallthru
      _
    // Predicated region
    $region22: #{tpu_custom_call.1} parent=1 // pred_check
      _
    $region23: #{tpu_custom_call.1} parent=1 // pred_check_branch
      %133 = sbr.rel (0) target = $region25
    $region24: #{tpu_custom_call.1} parent=1 // pred_region
      %134 = dma.done [#allocation5], 16
    $region25: #{tpu_custom_call.1} parent=1 // pred_fallthru
      _
    %135 = sfence
    %136 = vsyncpa [#allocation4], 1
    %137 = vsyncpa [#allocation5], 1

</llo_original>
